<compile_context>
chip_gen: v6e
topology: v6e:2x2x1
jax: 0.10.0
libtpu: 0.0.40
codegen_flags: <defaults>
</compile_context>

<pallas_src>
import functools

import jax
import jax.numpy as jnp
from jax.experimental import pallas as pl
from jax.experimental.pallas import tpu as pltpu


def _focal_terms_f32(x, t, gamma):
    """Elementwise focal terms, f32 math (matches the PyTorch module)."""
    x = x.astype(jnp.float32)
    t = t.astype(jnp.float32)
    # Stable BCE-with-logits, reduction='none':
    #   ce = max(x, 0) - x*t + log1p(exp(-|x|))
    ce = jnp.maximum(x, 0.0) - x * t + jnp.log1p(jnp.exp(-jnp.abs(x)))
    pt = jnp.exp(-ce)
    return (1.0 - pt) ** gamma * ce


def _focal_sum_kernel(x_ref, t_ref, o_ref, *, gamma, rows, tile_rows,
                      blocks_per_partial, need_mask):
    j = pl.program_id(1)

    # Zero this partial's accumulator block at the start of its inner loop.
    @pl.when(j == 0)
    def _():
        o_ref[...] = jnp.zeros_like(o_ref)

    x = x_ref[...].astype(jnp.float32)
    t = t_ref[...].astype(jnp.float32)

    # Numerically-stable BCE with logits (== F.binary_cross_entropy_with_logits
    # with reduction='none').
    ce = jnp.maximum(x, 0.0) - x * t + jnp.log1p(jnp.exp(-jnp.abs(x)))
    pt = jnp.exp(-ce)
    omp = 1.0 - pt

    # gamma is a trace-time Python constant (module attribute). Small integer
    # gamma -> repeated multiply on the VPU instead of pow (exp+log on EUP).
    if isinstance(gamma, int) and not isinstance(gamma, bool) and 0 <= gamma <= 8:
        w = jnp.ones_like(omp) if gamma == 0 else omp
        for _ in range(max(gamma - 1, 0)):
            w = w * omp
    else:
        w = omp ** gamma
    fl = w * ce

    if need_mask:
        # Zero contributions from rows past the logical end of the slab
        # (partial last row-block and/or overhang blocks of the core split).
        bid = pl.program_id(0) * blocks_per_partial + j
        row_idx = bid * tile_rows + jax.lax.broadcasted_iota(
            jnp.int32, fl.shape, 0)
        fl = jnp.where(row_idx < rows, fl, 0.0)

    # Vector accumulation: fold (tile_rows, 128) into (8, 128) with pure vreg
    # adds; no cross-lane reduce per step.
    o_ref[...] += fl.reshape(-1, 8, fl.shape[-1]).sum(axis=0)


def _focal_sum_pallas(x2d, t2d, gamma, tile_rows, num_partials):
    """Sum of focal terms over a (rows, 128) slab via Pallas."""
    rows, lanes = x2d.shape

    # Block rows: as large as requested, multiple of 8, not larger than rows.
    tr = min(tile_rows, rows)
    tr = max(8, (tr // 8) * 8)

    nb = pl.cdiv(rows, tr)                      # total row-blocks
    P = max(1, min(num_partials, nb))           # cross-core partials
    bpp = pl.cdiv(nb, P)                        # row-blocks per partial

    overhang = P * bpp > nb
    need_mask = (rows % tr != 0) or overhang

    def in_idx(p, j):
        bid = p * bpp + j
        if overhang:
            bid = jnp.minimum(bid, nb - 1)      # keep DMA in range; mask zeroes it
        return (bid, 0)

    kernel = functools.partial(
        _focal_sum_kernel, gamma=gamma, rows=rows, tile_rows=tr,
        blocks_per_partial=bpp, need_mask=need_mask)

    n_elems = rows * lanes
    cost = pl.CostEstimate(
        flops=10 * n_elems,
        transcendentals=3 * n_elems,
        bytes_accessed=n_elems * (x2d.dtype.itemsize + t2d.dtype.itemsize)
        + P * 8 * lanes * 4,
    )

    partials = pl.pallas_call(
        kernel,
        out_shape=jax.ShapeDtypeStruct((P * 8, lanes), jnp.float32),
        grid_spec=pltpu.PrefetchScalarGridSpec(
            num_scalar_prefetch=0,
            grid=(P, bpp),
            in_specs=[
                pl.BlockSpec((tr, lanes), in_idx),
                pl.BlockSpec((tr, lanes), in_idx),
            ],
            out_specs=pl.BlockSpec((8, lanes), lambda p, j: (p, 0)),
        ),
        compiler_params=pltpu.CompilerParams(
            dimension_semantics=("parallel", "arbitrary")),
        cost_estimate=cost,
    )(x2d, t2d)

    # Final cross-lane/sublane reduction of P*8*128 partial sums (tiny).
    return jnp.sum(partials)


def focal_loss(logits, targets, gamma=2, alpha=None, *,
               tile_rows=2048, num_partials=2):
    """Pallas implementation of FocalLoss.forward (alpha=None path)."""
    if alpha is not None:
        # TODO(synk): alpha[target] gather + post-mean scaling not implemented;
        # the module default is alpha=None.  Raised before launching any work.
        raise NotImplementedError("alpha weighting not supported")
    assert logits.shape == targets.shape

    n_total = logits.size
    lanes = 128

    flat_x = logits.reshape(-1)      # keep original dtypes (bf16 stays bf16)
    flat_t = targets.reshape(-1)

    rows = n_total // lanes
    main_elems = rows * lanes

    total = jnp.zeros((), jnp.float32)

    if rows >= 8:
        if main_elems == n_total:
            x2d = flat_x.reshape(rows, lanes)
            t2d = flat_t.reshape(rows, lanes)
        else:
            x2d = flat_x[:main_elems].reshape(rows, lanes)
            t2d = flat_t[:main_elems].reshape(rows, lanes)
        total = total + _focal_sum_pallas(x2d, t2d, gamma, tile_rows,
                                          num_partials)
        tail_start = main_elems
    else:
        tail_start = 0   # too small for a TPU tile: handle everything below

    if tail_start < n_total:
        # <128-element tail (or tiny input): plain jnp, negligible cost.
        total = total + jnp.sum(
            _focal_terms_f32(flat_x[tail_start:], flat_t[tail_start:], gamma))

    return total / jnp.float32(n_total)


def _focal_loss_ref(logits, targets, gamma=2):
    return jnp.mean(_focal_terms_f32(logits, targets, gamma))


if __name__ == "__main__":
    key = jax.random.PRNGKey(0)
    k1, k2 = jax.random.split(key)
    # NCHW logits and binary float targets, matching the PyTorch module usage.
    x = jax.random.normal(k1, (2, 4, 16, 16), dtype=jnp.float32)
    tgt = (jax.random.uniform(k2, (2, 4, 16, 16)) > 0.5).astype(jnp.float32)

    loss = focal_loss(x, tgt, gamma=2, alpha=None)
    loss = jax.block_until_ready(loss)

    ref = _focal_loss_ref(x, tgt, gamma=2)
    assert jnp.allclose(loss, ref, rtol=1e-5, atol=1e-6), (loss, ref)
    print("KERNEL_OK")
</pallas_src>

<mosaic_0001>
module attributes {stable_mosaic.version = 11 : i64} {
  func.func @_focal_sum_kernel(%arg0: i32, %arg1: i32, %arg2: memref<16x128xf32, #tpu.memory_space<vmem>>, %arg3: memref<16x128xf32, #tpu.memory_space<vmem>>, %arg4: memref<8x128xf32, #tpu.memory_space<vmem>>) attributes {dimension_semantics = [#tpu.dimension_semantics<parallel>, #tpu.dimension_semantics<arbitrary>], iteration_bounds = array<i64: 1, 1>, scalar_prefetch = 0 : i64, scratch_operands = 0 : i64, tpu.core_type = #tpu.core_type<tc>, window_params = [{transform_indices = @transform_0, window_bounds = array<i64: 16, 128>}, {transform_indices = @transform_1, window_bounds = array<i64: 16, 128>}, {transform_indices = @transform_2, window_bounds = array<i64: 8, 128>}]} {
    %c0_i32 = arith.constant 0 : i32
    %0 = arith.cmpi eq, %arg1, %c0_i32 : i32
    %1 = arith.extui %0 : i1 to i32
    %c0_i32_0 = arith.constant 0 : i32
    %2 = arith.cmpi ne, %1, %c0_i32_0 : i32
    scf.if %2 {
      %cst_12 = arith.constant 0.000000e+00 : f32
      %27 = vector.broadcast %cst_12 : f32 to vector<8x128xf32>
      %c0_13 = arith.constant 0 : index
      %c0_14 = arith.constant 0 : index
      %28 = vector.load %arg4[%c0_13, %c0_14] : memref<8x128xf32, #tpu.memory_space<vmem>>, vector<8x128xf32>
      tpu.vector_store %arg4[%c0_13, %c0_14], %27 {strides = array<i32>} : memref<8x128xf32, #tpu.memory_space<vmem>>, vector<8x128xf32>,
    } else {
    }
    %c0 = arith.constant 0 : index
    %c0_1 = arith.constant 0 : index
    %3 = vector.load %arg2[%c0, %c0_1] : memref<16x128xf32, #tpu.memory_space<vmem>>, vector<16x128xf32>
    %c0_2 = arith.constant 0 : index
    %c0_3 = arith.constant 0 : index
    %4 = vector.load %arg3[%c0_2, %c0_3] : memref<16x128xf32, #tpu.memory_space<vmem>>, vector<16x128xf32>
    %cst = arith.constant 0.000000e+00 : f32
    %5 = vector.broadcast %cst : f32 to vector<16x128xf32>
    %6 = arith.maximumf %3, %5 : vector<16x128xf32>
    %7 = arith.mulf %3, %4 : vector<16x128xf32>
    %8 = arith.subf %6, %7 : vector<16x128xf32>
    %9 = math.absf %3 : vector<16x128xf32>
    %cst_4 = arith.constant 0.000000e+00 : f32
    %10 = vector.broadcast %cst_4 : f32 to vector<16x128xf32>
    %11 = arith.subf %10, %9 : vector<16x128xf32>
    %12 = math.exp %11 : vector<16x128xf32>
    %13 = math.log1p %12 : vector<16x128xf32>
    %14 = arith.addf %8, %13 : vector<16x128xf32>
    %cst_5 = arith.constant 0.000000e+00 : f32
    %15 = vector.broadcast %cst_5 : f32 to vector<16x128xf32>
    %16 = arith.subf %15, %14 : vector<16x128xf32>
    %17 = math.exp %16 : vector<16x128xf32>
    %cst_6 = arith.constant 1.000000e+00 : f32
    %18 = vector.broadcast %cst_6 : f32 to vector<16x128xf32>
    %19 = arith.subf %18, %17 : vector<16x128xf32>
    %20 = arith.mulf %19, %19 : vector<16x128xf32>
    %21 = arith.mulf %20, %14 : vector<16x128xf32>
    %c0_7 = arith.constant 0 : index
    %c0_8 = arith.constant 0 : index
    %22 = vector.load %arg4[%c0_7, %c0_8] : memref<8x128xf32, #tpu.memory_space<vmem>>, vector<8x128xf32>
    %23 = vector.shape_cast %21 : vector<16x128xf32> to vector<2x8x128xf32>
    %cst_9 = arith.constant dense<0.000000e+00> : vector<8x128xf32>
    %24 = vector.multi_reduction <add>, %23, %cst_9 [0] : vector<2x8x128xf32> to vector<8x128xf32>
    %25 = arith.addf %22, %24 : vector<8x128xf32>
    %c0_10 = arith.constant 0 : index
    %c0_11 = arith.constant 0 : index
    %26 = vector.load %arg4[%c0_10, %c0_11] : memref<8x128xf32, #tpu.memory_space<vmem>>, vector<8x128xf32>
    tpu.vector_store %arg4[%c0_10, %c0_11], %25 {strides = array<i32>} : memref<8x128xf32, #tpu.memory_space<vmem>>, vector<8x128xf32>,
    return
  }
  func.func @transform_0(%arg0: i32, %arg1: i32) -> (i32, i32) {
    %c1_i32 = arith.constant 1 : i32
    %0 = arith.muli %arg0, %c1_i32 : i32
    %1 = arith.addi %0, %arg1 : i32
    %c0_i32 = arith.constant 0 : i32
    %c0_i32_0 = arith.constant 0 : i32
    return %1, %c0_i32 : i32, i32
  }
  func.func @transform_1(%arg0: i32, %arg1: i32) -> (i32, i32) {
    %c1_i32 = arith.constant 1 : i32
    %0 = arith.muli %arg0, %c1_i32 : i32
    %1 = arith.addi %0, %arg1 : i32
    %c0_i32 = arith.constant 0 : i32
    %c0_i32_0 = arith.constant 0 : i32
    return %1, %c0_i32 : i32, i32
  }
  func.func @transform_2(%arg0: i32, %arg1: i32) -> (i32, i32) {
    %c0_i32 = arith.constant 0 : i32
    %c0_i32_0 = arith.constant 0 : i32
    return %arg0, %c0_i32 : i32, i32
  }
}

</mosaic_0001>

<llo_original>
// kernel: tpu_custom_call.1
$region0: #{tpu_custom_call.1}
  #allocation0 [shape = 'u32[]', space=smem, size = 0x4, offset = 0x4, fixed_abs, tag = 'smem constant byte address 0x4 - core index']
  #allocation1 [shape = 'u32[144,128]{1,0:T(1,128)}', space=vmem, size = 0x12000, scoped, tag = 'internal scratch']
  %s0 = inlined_call_operand.hbm [shape: f32[16,128], index: 0, kind: input, shape index: {}]
  %s1 = inlined_call_operand.hbm [shape: f32[16,128], index: 1, kind: input, shape index: {}]
  %s2 = inlined_call_operand.hbm [shape: f32[8,128], index: 2, kind: output, shape index: {}]
  %s3 = sld [smem:[#allocation0]]
  $region30: #{tpu_custom_call.1} parent=0
    _
  %s5 = ssub.s32 1, %s3
  %s6 = scalar_select 0, %s5, %s3
  $region1: #{tpu_custom_call.1} parent=0
    #allocation2 [shape = 'u8[8192]{0}', space=vmem, size = 0x2000, scoped, tag = 'input window, operand 0, single buffered']
    #allocation3 [shape = 's32[1]{0}', space=sflag, size = 0x4, scoped, tag = 'scoped memory for tpu_custom_call.1']
    #allocation4 [shape = 's32[1]{0}', space=sflag, size = 0x4, scoped, tag = 'scoped memory for tpu_custom_call.1']
    #allocation5 [shape = 'u8[8192]{0}', space=vmem, size = 0x2000, scoped, tag = 'input window, operand 1, single buffered']
    #allocation6 [shape = 's32[1]{0}', space=sflag, size = 0x4, scoped, tag = 'scoped memory for tpu_custom_call.1']
    #allocation7 [shape = 'u8[4096]{0}', space=vmem, size = 0x1000, scoped, tag = 'output window, operand 0, single buffered']
    %7 = vsyncpa [#allocation3], 0
    %8 = vsyncpa [#allocation6], 0
    %9 = vsyncpa [#allocation4], 0
    // Predicated region
    $region2: #{tpu_custom_call.1} parent=1 // pred_check
      _
    $region3: #{tpu_custom_call.1} parent=1 // pred_check_branch
      %11 = sbr.rel (0) target = $region5
    $region4: #{tpu_custom_call.1} parent=1 // pred_region
      %s12 = sadd.s32 0, 0
      %s13 = smul.u32 2, %s12
      %s15 = ssub.s32 256, 256
      %16 = vsyncadd [#allocation3], %s15
      %s17 = smul.addr %s13, 128
      %s18 = scalar_lea.hbm %s0, %s17
      %s19 = sshll.u32 [#allocation2], 4
      %s20 = int_to_ptr.vmem [resolvable:$true] %s19
      %25 = dma.hbm_to_vmem [thread:$0]  %s18, 256, %s20, [#allocation3], 128, 128, 8
    $region5: #{tpu_custom_call.1} parent=1 // pred_fallthru
      _
    // Predicated region
    $region6: #{tpu_custom_call.1} parent=1 // pred_check
      _
    $region7: #{tpu_custom_call.1} parent=1 // pred_check_branch
      %27 = sbr.rel (0) target = $region9
    $region8: #{tpu_custom_call.1} parent=1 // pred_region
      %s28 = sadd.s32 0, 0
      %s29 = smul.u32 2, %s28
      %s31 = ssub.s32 256, 256
      %32 = vsyncadd [#allocation6], %s31
      %s33 = smul.addr %s29, 128
      %s34 = scalar_lea.hbm %s1, %s33
      %s35 = sshll.u32 [#allocation5], 4
      %s36 = int_to_ptr.vmem [resolvable:$true] %s35
      %41 = dma.hbm_to_vmem [thread:$0]  %s34, 256, %s36, [#allocation6], 128, 128, 8
    $region9: #{tpu_custom_call.1} parent=1 // pred_fallthru
      _
    // Predicated region
    $region10: #{tpu_custom_call.1} parent=1 // pred_check
      _
    $region11: #{tpu_custom_call.1} parent=1 // pred_check_branch
      %43 = sbr.rel (0) target = $region13
    $region12: #{tpu_custom_call.1} parent=1 // pred_region
      %44 = dma.done [#allocation3], 256
    $region13: #{tpu_custom_call.1} parent=1 // pred_fallthru
      _
    // Predicated region
    $region14: #{tpu_custom_call.1} parent=1 // pred_check
      _
    $region15: #{tpu_custom_call.1} parent=1 // pred_check_branch
      %46 = sbr.rel (0) target = $region17
    $region16: #{tpu_custom_call.1} parent=1 // pred_region
      %47 = dma.done [#allocation6], 256
    $region17: #{tpu_custom_call.1} parent=1 // pred_fallthru
      _
    %s48 = sadd.s32 0, 0
    %s49 = smul.u32 2, %s48
    %s50 = sadd.s32 0, 0
    %s51 = smul.u32 2, %s50
    %p52 = scmp.eq.s32.totalorder 0, 0
    // Predicated region
    $region18: #{tpu_custom_call.1} parent=1 // pred_check
      %p53 = pneg %p52
    $region19: #{tpu_custom_call.1} parent=1 // pred_check_branch
      %55 = sbr.rel (%p53) target = $region21
    $region20: #{tpu_custom_call.1} parent=1 // pred_region
      %56 = vst [vmem:[#allocation7] sm:$0xff] 0.0
    $region21: #{tpu_custom_call.1} parent=1 // pred_fallthru
      _
    %v57 = vld [vmem:[#allocation2] sm:$0xff]
    %v58 = vld [vmem:[#allocation2 + $0x8] sm:$0xff]
    %v59 = vld [vmem:[#allocation5] sm:$0xff]
    %v60 = vld [vmem:[#allocation5 + $0x8] sm:$0xff]
    %v61 = vmax.f32 %v57, 0.0
    %v62 = vmax.f32 %v58, 0.0
    %v63 = vmul.f32 %v57, %v59
    %v64 = vmul.f32 %v58, %v60
    %v65 = vsub.f32 %v61, %v63
    %v66 = vsub.f32 %v62, %v64
    %v67 = vand.u32 2147483647, %v57
    %v68 = vand.u32 2147483647, %v58
    %v69 = vsub.f32 0.0, %v67
    %v70 = vsub.f32 0.0, %v68
    %v71 = vmul.f32 %v69, 1.442695
    %v72 = vpow.pop %v71
    %v73 = vmul.f32 %v70, 1.442695
    %v74 = vpow.pop %v73
    %v75 = vadd.f32 %v72, 1.0
    %v76 = vlog2.pop %v75
    %v77 = vmul.f32 %v76, 0.6931472
    %v78 = vmul.f32 -0.5, %v72
    %v79 = vadd.f32 %v78, 1.0
    %v80 = vmul.f32 %v79, %v72
    %v81 = vand.u32 2147483647, %v72
    %vm82 = vcmp.lt.f32.partialorder %v81, 0.0004427343
    %v83 = vsel %vm82, %v80, %v77
    %v84 = vadd.f32 %v74, 1.0
    %v85 = vlog2.pop %v84
    %v86 = vmul.f32 %v85, 0.6931472
    %v87 = vmul.f32 -0.5, %v74
    %v88 = vadd.f32 %v87, 1.0
    %v89 = vmul.f32 %v88, %v74
    %v90 = vand.u32 2147483647, %v74
    %vm91 = vcmp.lt.f32.partialorder %v90, 0.0004427343
    %v92 = vsel %vm91, %v89, %v86
    %v93 = vadd.f32 %v65, %v83
    %v94 = vadd.f32 %v66, %v92
    %v95 = vsub.f32 0.0, %v93
    %v96 = vsub.f32 0.0, %v94
    %v97 = vmul.f32 %v95, 1.442695
    %v98 = vpow.pop %v97
    %v99 = vmul.f32 %v96, 1.442695
    %v100 = vpow.pop %v99
    %v101 = vsub.f32 1.0, %v98
    %v102 = vsub.f32 1.0, %v100
    %v103 = vmul.f32 %v101, %v101
    %v104 = vmul.f32 %v102, %v102
    %v105 = vmul.f32 %v103, %v93
    %v106 = vmul.f32 %v104, %v94
    %v107 = vld [vmem:[#allocation7] sm:$0xff]
    %v108 = vadd.f32 %v105, %v106
    %v109 = vadd.f32 %v107, %v108
    %110 = vst [vmem:[#allocation7] sm:$0xff] %v109
    // Predicated region
    $region22: #{tpu_custom_call.1} parent=1 // pred_check
      _
    $region23: #{tpu_custom_call.1} parent=1 // pred_check_branch
      %112 = sbr.rel (0) target = $region25
    $region24: #{tpu_custom_call.1} parent=1 // pred_region
      %s114 = ssub.s32 128, 128
      %115 = vsyncadd [#allocation4], %s114
      %s117 = sshll.u32 [#allocation7], 4
      %s118 = int_to_ptr.vmem [resolvable:$true] %s117
      %120 = dma.vmem_to_hbm [thread:$0]  %s118, 128, %s2, [#allocation4]
    $region25: #{tpu_custom_call.1} parent=1 // pred_fallthru
      _
    // Predicated region
    $region26: #{tpu_custom_call.1} parent=1 // pred_check
      _
    $region27: #{tpu_custom_call.1} parent=1 // pred_check_branch
      %122 = sbr.rel (0) target = $region29
    $region28: #{tpu_custom_call.1} parent=1 // pred_region
      %123 = dma.done [#allocation4], 128
    $region29: #{tpu_custom_call.1} parent=1 // pred_fallthru
      _
    %124 = vsyncpa [#allocation3], 1
    %125 = vsyncpa [#allocation6], 1
    %126 = vsyncpa [#allocation4], 1

</llo_original>
